<compile_context>
chip_gen: v7x
topology: tpu7x:2x2x1
jax: 0.10.0
libtpu: 0.0.40
codegen_flags: <defaults>
</compile_context>

<pallas_src>
import functools

import jax
import jax.numpy as jnp
from jax.experimental import pallas as pl
from jax.experimental.pallas import tpu as pltpu


def _pitch_kernel(layer_dims, w_ref, x_ref, *o_refs):
    # w_ref: [K_total, N] (VMEM-resident), x_ref: [1, N, TT]
    # o_refs[i]: [1, 2c_i, s_i, TT]  -- sublane-aligned K-split of the matmul result.
    y = jnp.dot(w_ref[...], x_ref[0], preferred_element_type=jnp.float32)  # [K_total, TT]
    tt = y.shape[-1]
    off = 0
    for o_ref, (c2, s) in zip(o_refs, layer_dims):
        k = c2 * s
        o_ref[0] = y[off:off + k].reshape(c2, s, tt).astype(o_ref.dtype)
        off += k


def _choose_t_tile(T, B, cap=4096):
    """Lane-dense tile along T.

    Full dim if small (satisfies the (8,128) rule by equalling the array dim);
    otherwise a multiple of 128 up to `cap` lanes to amortize the ~0.35us/step
    overhead.  Shrunk if needed so the grid has >=2 steps (v7x megacore occupancy).
    """
    if T <= 128:
        return T
    tt = 128 * min(cap // 128, T // 128)
    # Megacore: make sure both TensorCores can get at least one grid step.
    while tt > 128 and B * ((T + tt - 1) // tt) < 2:
        tt = max(128, ((tt // 2) // 128) * 128)
    return tt


def _out_index_map(b, t):
    return (b, 0, 0, t)


def _fused_pitch_forward(w_all, x, latent_rep_channels, *, out_dtype):
    """w_all: [K_total, N], x: [B, N, T] -> tuple of [B, 2c_i, s_i, T] arrays."""
    K_total, N = w_all.shape
    B, N2, T = x.shape
    assert N == N2, (N, N2)
    layer_dims = tuple((2 * c, s) for c, s in latent_rep_channels)
    assert sum(c2 * s for c2, s in layer_dims) == K_total

    TT = _choose_t_tile(T, B)
    grid = (B, pl.cdiv(T, TT))

    out_shapes = tuple(
        jax.ShapeDtypeStruct((B, c2, s, T), out_dtype) for c2, s in layer_dims
    )
    out_specs = tuple(
        pl.BlockSpec((1, c2, s, TT), _out_index_map) for c2, s in layer_dims
    )

    x_item = jnp.dtype(x.dtype).itemsize
    w_item = jnp.dtype(w_all.dtype).itemsize
    o_item = jnp.dtype(out_dtype).itemsize
    cost = pl.CostEstimate(
        flops=2 * B * T * N * K_total,
        transcendentals=0,
        bytes_accessed=(B * N * T * x_item          # x read (once)
                        + K_total * N * w_item      # W read (once, VMEM-resident)
                        + B * K_total * T * o_item  # y write (dominant stream)
                        ),
    )

    kernel = functools.partial(_pitch_kernel, layer_dims)

    return pl.pallas_call(
        kernel,
        out_shape=out_shapes,
        grid_spec=pltpu.PrefetchScalarGridSpec(
            num_scalar_prefetch=0,
            grid=grid,
            in_specs=[
                # W_all stays resident in VMEM across all grid steps.
                pl.BlockSpec((K_total, N), lambda b, t: (0, 0)),
                # x tile: [1, N, TT] with T on lanes.
                pl.BlockSpec((1, N, TT), lambda b, t: (b, 0, t)),
            ],
            out_specs=out_specs,
        ),
        compiler_params=pltpu.CompilerParams(
            dimension_semantics=("parallel", "parallel"),
        ),
        cost_estimate=cost,
    )(w_all, x)


def init_pitch_extractor_params(key, notes_num, latent_rep_channels):
    """One weight [K_i, notes_num] per layer (Conv1d kernel_size=1, bias=False)."""
    weights = []
    for c, s in latent_rep_channels:
        K = 2 * c * s
        key, sub = jax.random.split(key)
        scale = 1.0 / jnp.sqrt(jnp.float32(notes_num))
        W = jax.random.uniform(
            sub, (K, notes_num), dtype=jnp.float32, minval=-scale, maxval=scale
        )
        weights.append(W)
    return weights


def pitch_extractor_forward(x, weights, latent_rep_channels, *,
                            out_dtype=jnp.float32, transpose_output=True):
    """
    x: [B, notes_num, T]
    Returns a list of tensors:
      transpose_output=True  (default, matches the PyTorch module):
          i-th output has shape [B, 2*c_i, T, s_i]
      transpose_output=False (fast path, skips a full HBM pass over the outputs):
          i-th output has shape [B, 2*c_i, s_i, T]
    out_dtype=jnp.bfloat16 halves the dominant output HBM stream (f32 MXU accumulate,
    single rounding on the result).
    """
    w_all = jnp.concatenate(weights, axis=0)                    # [K_total, N], tiny
    outs = _fused_pitch_forward(w_all, x, latent_rep_channels, out_dtype=out_dtype)
    outs = list(outs)
    if transpose_output:
        # Consumer-side transpose (NOT inside the kernel: s=8/16 lanes would force
        # masked stores).  Avoid entirely by consuming [B, 2c, s, T] when possible.
        outs = [jnp.transpose(o, (0, 1, 3, 2)) for o in outs]   # [B, 2c, T, s]
    return outs


if __name__ == "__main__":
    # Small, deterministic example.
    B = 2
    notes_num = 16
    T = 8
    latent_rep_channels = [[4, 16], [2, 8]]   # K = 128, 32 -> K_total = 160

    key = jax.random.PRNGKey(0)
    kx, kw, kx2 = jax.random.split(key, 3)
    x = jax.random.normal(kx, (B, notes_num, T), dtype=jnp.float32)
    weights = init_pitch_extractor_params(kw, notes_num, latent_rep_channels)

    # 1) f32 path, module-matching [B, 2c, T, s] layout (exact match to reference math).
    outs = pitch_extractor_forward(x, weights, latent_rep_channels)
    outs = [jax.block_until_ready(o) for o in outs]
    for o, (c, s), W in zip(outs, latent_rep_channels, weights):
        assert o.shape == (B, 2 * c, T, s), o.shape
        y_ref = jnp.einsum("kn,bnt->bkt", W, x)                          # [B, K, T]
        y_ref = y_ref.reshape(B, 2 * c, s, T).transpose(0, 1, 3, 2)      # [B, 2c, T, s]
        assert jnp.allclose(o, y_ref, atol=1e-5, rtol=1e-5)

    # 2) Multi-tile + ragged-T + bf16-output + no-transpose fast path.
    B2, T2 = 1, 200                      # grid = (1, 2), second T-tile ragged
    x2 = jax.random.normal(kx2, (B2, notes_num, T2), dtype=jnp.float32)
    outs2 = pitch_extractor_forward(
        x2, weights, latent_rep_channels,
        out_dtype=jnp.bfloat16, transpose_output=False,
    )
    outs2 = [jax.block_until_ready(o) for o in outs2]
    for o, (c, s), W in zip(outs2, latent_rep_channels, weights):
        assert o.shape == (B2, 2 * c, s, T2), o.shape
        y_ref = jnp.einsum("kn,bnt->bkt", W, x2).reshape(B2, 2 * c, s, T2)
        assert jnp.allclose(o.astype(jnp.float32), y_ref, atol=5e-2, rtol=5e-2)

    print("KERNEL_OK")
</pallas_src>

<mosaic_0001>
module attributes {stable_mosaic.version = 11 : i64} {
  func.func @_pitch_kernel(%arg0: i32, %arg1: i32, %arg2: memref<160x16xf32, #tpu.memory_space<vmem>>, %arg3: memref<1x16x8xf32, #tpu.memory_space<vmem>>, %arg4: memref<1x8x16x8xf32, #tpu.memory_space<vmem>>, %arg5: memref<1x4x8x8xf32, #tpu.memory_space<vmem>>) attributes {dimension_semantics = [#tpu.dimension_semantics<parallel>, #tpu.dimension_semantics<parallel>], iteration_bounds = array<i64: 2, 1>, scalar_prefetch = 0 : i64, scratch_operands = 0 : i64, tpu.core_type = #tpu.core_type<tc>, window_params = [{pipeline_mode = #tpu.pipeline_mode<synchronous>, transform_indices = @transform_0, window_bounds = array<i64: 160, 16>}, {transform_indices = @transform_1, window_bounds = array<i64: 1, 16, 8>}, {transform_indices = @transform_2, window_bounds = array<i64: 1, 8, 16, 8>}, {transform_indices = @transform_3, window_bounds = array<i64: 1, 4, 8, 8>}]} {
    %c0 = arith.constant 0 : index
    %c0_0 = arith.constant 0 : index
    %0 = vector.load %arg2[%c0, %c0_0] : memref<160x16xf32, #tpu.memory_space<vmem>>, vector<160x16xf32>
    %c0_1 = arith.constant 0 : index
    %c0_2 = arith.constant 0 : index
    %c0_3 = arith.constant 0 : index
    %1 = vector.load %arg3[%c0_1, %c0_2, %c0_3] : memref<1x16x8xf32, #tpu.memory_space<vmem>>, vector<1x16x8xf32>
    %2 = vector.shape_cast %1 : vector<1x16x8xf32> to vector<16x8xf32>
    %cst = arith.constant dense<0.000000e+00> : vector<160x8xf32>
    %3 = tpu.matmul %0, %2, %cst {dimension_numbers = #tpu.dot_dimension_numbers<[1], [0], [0], [1], [0, 0, 1, 1], [], []>} : vector<160x16xf32>, vector<16x8xf32>, vector<160x8xf32> -> vector<160x8xf32>
    %4 = vector.extract_strided_slice %3 {offsets = [0, 0], sizes = [128, 8], strides = [1, 1]} : vector<160x8xf32> to vector<128x8xf32>
    %5 = vector.shape_cast %4 : vector<128x8xf32> to vector<8x16x8xf32>
    %c0_4 = arith.constant 0 : index
    %c0_5 = arith.constant 0 : index
    %c0_6 = arith.constant 0 : index
    %c0_7 = arith.constant 0 : index
    %6 = vector.load %arg4[%c0_4, %c0_5, %c0_6, %c0_7] : memref<1x8x16x8xf32, #tpu.memory_space<vmem>>, vector<1x8x16x8xf32>
    %7 = vector.shape_cast %6 : vector<1x8x16x8xf32> to vector<8x16x8xf32>
    %8 = vector.shape_cast %5 : vector<8x16x8xf32> to vector<1x8x16x8xf32>
    tpu.vector_store %arg4[%c0_4, %c0_5, %c0_6, %c0_7], %8 {strides = array<i32>} : memref<1x8x16x8xf32, #tpu.memory_space<vmem>>, vector<1x8x16x8xf32>,
    %9 = vector.extract_strided_slice %3 {offsets = [128, 0], sizes = [32, 8], strides = [1, 1]} : vector<160x8xf32> to vector<32x8xf32>
    %10 = vector.shape_cast %9 : vector<32x8xf32> to vector<4x8x8xf32>
    %c0_8 = arith.constant 0 : index
    %c0_9 = arith.constant 0 : index
    %c0_10 = arith.constant 0 : index
    %c0_11 = arith.constant 0 : index
    %11 = vector.load %arg5[%c0_8, %c0_9, %c0_10, %c0_11] : memref<1x4x8x8xf32, #tpu.memory_space<vmem>>, vector<1x4x8x8xf32>
    %12 = vector.shape_cast %11 : vector<1x4x8x8xf32> to vector<4x8x8xf32>
    %13 = vector.shape_cast %10 : vector<4x8x8xf32> to vector<1x4x8x8xf32>
    tpu.vector_store %arg5[%c0_8, %c0_9, %c0_10, %c0_11], %13 {strides = array<i32>} : memref<1x4x8x8xf32, #tpu.memory_space<vmem>>, vector<1x4x8x8xf32>,
    return
  }
  func.func @transform_0(%arg0: i32, %arg1: i32) -> (i32, i32) {
    %c0_i32 = arith.constant 0 : i32
    %c0_i32_0 = arith.constant 0 : i32
    %c0_i32_1 = arith.constant 0 : i32
    return %c0_i32, %c0_i32_0 : i32, i32
  }
  func.func @transform_1(%arg0: i32, %arg1: i32) -> (i32, i32, i32) {
    %c0_i32 = arith.constant 0 : i32
    %c0_i32_0 = arith.constant 0 : i32
    return %arg0, %c0_i32, %arg1 : i32, i32, i32
  }
  func.func @transform_2(%arg0: i32, %arg1: i32) -> (i32, i32, i32, i32) {
    %c0_i32 = arith.constant 0 : i32
    %c0_i32_0 = arith.constant 0 : i32
    %c0_i32_1 = arith.constant 0 : i32
    return %arg0, %c0_i32, %c0_i32_0, %arg1 : i32, i32, i32, i32
  }
  func.func @transform_3(%arg0: i32, %arg1: i32) -> (i32, i32, i32, i32) {
    %c0_i32 = arith.constant 0 : i32
    %c0_i32_0 = arith.constant 0 : i32
    %c0_i32_1 = arith.constant 0 : i32
    return %arg0, %c0_i32, %c0_i32_0, %arg1 : i32, i32, i32, i32
  }
}

</mosaic_0001>

<llo_original>
// kernel: tpu_custom_call.1
$region0: #{tpu_custom_call.1}
  #allocation0 [shape = 'u32[]', space=smem, size = 0x4, offset = 0x4, fixed_abs, tag = 'smem constant byte address 0x4 - core index']
  #allocation1 [shape = 'u32[144,128]{1,0:T(1,128)}', space=vmem, size = 0x12000, scoped, tag = 'internal scratch']
  %s0 = inlined_call_operand.vmem [shape: f32[160,16], index: 0, kind: input, shape index: {}]
  %s1 = inlined_call_operand.vmem [shape: f32[2,16,8], index: 1, kind: input, shape index: {}]
  %s2 = inlined_call_operand.vmem [shape: f32[2,8,16,8], index: 2, kind: output, shape index: {0}]
  %s3 = inlined_call_operand.hbm [shape: f32[2,4,8,8], index: 3, kind: output, shape index: {1}]
  %4 = xla_tuple %s2, %s3
  %s5 = sld [smem:[#allocation0]]
  $region49: #{tpu_custom_call.1} parent=0
    _
  %s7 = ssub.s32 1, %s5
  %s8 = scalar_select 0, %s7, %s5
  $region1: #{tpu_custom_call.1} parent=0
    #allocation2 [shape = 'u8[32768]{0}', space=vmem, size = 0x8000, scoped, tag = 'output window, operand 1']
    #allocation3 [shape = 's32[2]{0}', space=sflag, size = 0x8, scoped, tag = 'scoped memory for tpu_custom_call.1']
    %9 = vsyncpa [#allocation3], 0
    %s10 = scalar_lea.sflag [#allocation3], 1
    %11 = vsyncpa %s10, 0
    loop: start=0, step=1, limit=4
    $region2: #{tpu_custom_call.1} parent=1 // loop_pre_header
      _
    $region3: #{tpu_custom_call.1} parent=1 // loop_header
      %s13 = sphi 0, %s17
      %p14 = scmp.ge.s32.totalorder %s13, 4
      %s20 = sphi 0, %s32
      %s21 = sphi 0, %s28
      %s22 = sphi 0, %s20
      %s23 = sphi 0, %s21
      %s24 = sphi 0, %s22
      %s25 = sphi 0, %s23
      %s33 = sphi 0, %s33
      %s35 = sphi 0, %s33
      %s36 = sphi 0, %s35
      %s50 = sphi 0, %s36
      %s58 = sphi 0, %s60
      %s61 = sphi 0, %s58
      %s62 = sphi 0, %s61
      %s78 = sphi 0, %s62
      %s86 = sphi 0, %s88
      %s89 = sphi 0, %s86
      %s90 = sphi 0, %s89
      %s106 = sphi 0, %s90
      %s114 = sphi 0, %s116
      %s117 = sphi 0, %s114
      %s118 = sphi 0, %s117
      %s134 = sphi 0, %s118
    $region4: #{tpu_custom_call.1} parent=1 // loop_header_branch
      %16 = sbr.rel (%p14) target = $region8
    $region5: #{tpu_custom_call.1} parent=1 // loop_body
      %s18 = ssub.s32 %s13, 1
      %s19 = ssub.s32 %s13, 2
      %s26 = sadd.s32 1, %s21
      %p27 = scmp.ge.s32.totalorder %s26, 1
      %s28 = scalar_select %p27, 0, %s26
      %s29 = sadd.s32 1, %s20
      %s30 = scalar_select %p27, %s29, %s20
      %p31 = scmp.ge.s32.totalorder %s30, 2
      %s32 = scalar_select %p31, 0, %s30
      %s34 = sadd.s32 %s33, 1
      %p37 = scmp.eq.s32.totalorder %s13, 1
      %p38 = scmp.ne.s32.totalorder %s33, %s35
      %p39 = scmp.eq.s32.totalorder %s13, 0
      %p40 = por %p38, %p39
      %p41 = scmp.ne.s32.totalorder %s33, %s35
      %p42 = scmp.eq.s32.totalorder %s18, 1
      %p43 = por %p41, %p42
      %p44 = scmp.ne.s32.totalorder %s35, %s36
      %p45 = scmp.eq.s32.totalorder %s18, 0
      %p46 = por %p44, %p45
      %p47 = scmp.ne.s32.totalorder %s35, %s36
      %p48 = scmp.eq.s32.totalorder %s19, 1
      %p49 = por %p47, %p48
      %p51 = scmp.ne.s32.totalorder %s36, %s50
      %p52 = scmp.eq.s32.totalorder %s19, 0
      %p53 = por %p51, %p52
      %s54 = ssub.s32 %s20, %s32
      %s55 = ssub.s32 %s21, %s28
      %s56 = sor.u32 %s54, %s55
      %p57 = scmp.eq.s32.totalorder %s56, 0
      %s59 = sadd.s32 %s58, 1
      %s60 = scalar_select %p57, %s58, %s59
      %p63 = pneg %p57
      %p64 = scmp.eq.s32.totalorder %s13, 1
      %p65 = por %p63, %p64
      %p66 = scmp.ne.s32.totalorder %s58, %s61
      %p67 = scmp.eq.s32.totalorder %s13, 0
      %p68 = por %p66, %p67
      %p69 = scmp.ne.s32.totalorder %s58, %s61
      %p70 = scmp.eq.s32.totalorder %s18, 1
      %p71 = por %p69, %p70
      %p72 = scmp.ne.s32.totalorder %s61, %s62
      %p73 = scmp.eq.s32.totalorder %s18, 0
      %p74 = por %p72, %p73
      %p75 = scmp.ne.s32.totalorder %s61, %s62
      %p76 = scmp.eq.s32.totalorder %s19, 1
      %p77 = por %p75, %p76
      %p79 = scmp.ne.s32.totalorder %s62, %s78
      %p80 = scmp.eq.s32.totalorder %s19, 0
      %p81 = por %p79, %p80
      %s82 = ssub.s32 %s20, %s32
      %s83 = ssub.s32 %s21, %s28
      %s84 = sor.u32 %s82, %s83
      %p85 = scmp.eq.s32.totalorder %s84, 0
      %s87 = sadd.s32 %s86, 1
      %s88 = scalar_select %p85, %s86, %s87
      %p91 = pneg %p85
      %p92 = scmp.eq.s32.totalorder %s13, 1
      %p93 = por %p91, %p92
      %p94 = scmp.ne.s32.totalorder %s86, %s89
      %p95 = scmp.eq.s32.totalorder %s13, 0
      %p96 = por %p94, %p95
      %p97 = scmp.ne.s32.totalorder %s86, %s89
      %p98 = scmp.eq.s32.totalorder %s18, 1
      %p99 = por %p97, %p98
      %p100 = scmp.ne.s32.totalorder %s89, %s90
      %p101 = scmp.eq.s32.totalorder %s18, 0
      %p102 = por %p100, %p101
      %p103 = scmp.ne.s32.totalorder %s89, %s90
      %p104 = scmp.eq.s32.totalorder %s19, 1
      %p105 = por %p103, %p104
      %p107 = scmp.ne.s32.totalorder %s90, %s106
      %p108 = scmp.eq.s32.totalorder %s19, 0
      %p109 = por %p107, %p108
      %s110 = ssub.s32 %s20, %s32
      %s111 = ssub.s32 %s21, %s28
      %s112 = sor.u32 %s110, %s111
      %p113 = scmp.eq.s32.totalorder %s112, 0
      %s115 = sadd.s32 %s114, 1
      %s116 = scalar_select %p113, %s114, %s115
      %p119 = pneg %p113
      %p120 = scmp.eq.s32.totalorder %s13, 1
      %p121 = por %p119, %p120
      %p122 = scmp.ne.s32.totalorder %s114, %s117
      %p123 = scmp.eq.s32.totalorder %s13, 0
      %p124 = por %p122, %p123
      %p125 = scmp.ne.s32.totalorder %s114, %s117
      %p126 = scmp.eq.s32.totalorder %s18, 1
      %p127 = por %p125, %p126
      %p128 = scmp.ne.s32.totalorder %s117, %s118
      %p129 = scmp.eq.s32.totalorder %s18, 0
      %p130 = por %p128, %p129
      %p131 = scmp.ne.s32.totalorder %s117, %s118
      %p132 = scmp.eq.s32.totalorder %s19, 1
      %p133 = por %p131, %p132
      %p135 = scmp.ne.s32.totalorder %s118, %s134
      %p136 = scmp.eq.s32.totalorder %s19, 0
      %p137 = por %p135, %p136
      %p138 = scmp.le.s32.totalorder 1, %s13
      %p139 = scmp.lt.s32.totalorder %s13, 3
      %p140 = pnand %p138, %p139
      %p141 = pneg %p140
      // Predicated region
      $region9: #{tpu_custom_call.1} parent=5 // pred_check
        _
      $region10: #{tpu_custom_call.1} parent=5 // pred_check_branch
        %143 = sbr.rel (%p140) target = $region12
      $region11: #{tpu_custom_call.1} parent=5 // pred_region
        %s144 = ssub.s32 %s13, 1
        // Predicated region
        $region13: #{tpu_custom_call.1} parent=11 // pred_check
          %p145 = pneg %p46
        $region14: #{tpu_custom_call.1} parent=11 // pred_check_branch
          %147 = sbr.rel (%p145) target = $region16
        $region15: #{tpu_custom_call.1} parent=11 // pred_region
          _
        $region16: #{tpu_custom_call.1} parent=11 // pred_fallthru
          _
      $region12: #{tpu_custom_call.1} parent=5 // pred_fallthru
        _
      %p148 = scmp.lt.s32.totalorder %s13, 2
      // Predicated region
      $region17: #{tpu_custom_call.1} parent=5 // pred_check
        %p149 = pneg %p148
      $region18: #{tpu_custom_call.1} parent=5 // pred_check_branch
        %151 = sbr.rel (%p149) target = $region20
      $region19: #{tpu_custom_call.1} parent=5 // pred_region
        // Predicated region
        $region21: #{tpu_custom_call.1} parent=19 // pred_check
          %p152 = pneg %p68
        $region22: #{tpu_custom_call.1} parent=19 // pred_check_branch
          %154 = sbr.rel (%p152) target = $region24
        $region23: #{tpu_custom_call.1} parent=19 // pred_region
          %p155 = scmp.lt.s32.totalorder %s20, 1
          %s156 = scalar_select %p155, %s20, 1
          %p157 = scmp.lt.s32.totalorder %s21, 0
          %s158 = scalar_select %p157, %s21, 0
          %s159 = smul.addr %s156, 2
          %s160 = sadd.s32 %s158, %s159
          %s161 = smul.addr %s160, 8
          %s162 = scalar_lea.vmem %s1, %s161
        $region24: #{tpu_custom_call.1} parent=19 // pred_fallthru
          _
      $region20: #{tpu_custom_call.1} parent=5 // pred_fallthru
        _
      %p163 = scmp.le.s32.totalorder 1, %s13
      %p164 = scmp.lt.s32.totalorder %s13, 3
      %p165 = pnand %p163, %p164
      %p166 = pneg %p165
      // Predicated region
      $region25: #{tpu_custom_call.1} parent=5 // pred_check
        _
      $region26: #{tpu_custom_call.1} parent=5 // pred_check_branch
        %168 = sbr.rel (%p165) target = $region28
      $region27: #{tpu_custom_call.1} parent=5 // pred_region
        %s169 = ssub.s32 %s13, 1
        %p170 = pneg %p46
        %p171 = pneg %p43
        %p172 = scmp.lt.s32.totalorder %s22, 1
        %s173 = scalar_select %p172, %s22, 1
        %p174 = scmp.lt.s32.totalorder %s23, 0
        %s175 = scalar_select %p174, %s23, 0
        %s176 = smul.addr %s173, 2
        %s177 = sadd.s32 %s175, %s176
        %s178 = smul.addr %s177, 8
        %s179 = scalar_lea.vmem %s1, %s178
        %p180 = pneg %p74
        %p181 = pneg %p71
        %p182 = pneg %p102
        %p183 = pneg %p99
        %p184 = scmp.lt.s32.totalorder %s22, 1
        %s185 = scalar_select %p184, %s22, 1
        %p186 = scmp.lt.s32.totalorder %s23, 0
        %s187 = scalar_select %p186, %s23, 0
        %s188 = smul.addr %s185, 16
        %s189 = sadd.s32 %s187, %s188
        %s190 = smul.addr %s189, 8
        %s191 = scalar_lea.vmem %s2, %s190
        %p192 = pneg %p130
        %p193 = pneg %p127
        %s194 = sand.u32 %s117, 1
        %s195 = scalar_lea.sflag [#allocation3], %s194
        %s196 = sand.u32 %s117, 1
        %s197 = smul.addr %s196, 32
        %s198 = scalar_lea.vmem [#allocation2], %s197
        %p199 = scmp.lt.s32.totalorder %s22, 1
        %s200 = scalar_select %p199, %s22, 1
        %p201 = scmp.lt.s32.totalorder %s23, 0
        %s202 = scalar_select %p201, %s23, 0
        %s203 = smul.addr %s200, 2
        %s204 = sadd.s32 %s202, %s203
        %s205 = smul.addr %s204, 8
        %s206 = scalar_lea.vmem %s1, %s205
        %p207 = scmp.lt.s32.totalorder %s22, 1
        %s208 = scalar_select %p207, %s22, 1
        %p209 = scmp.lt.s32.totalorder %s23, 0
        %s210 = scalar_select %p209, %s23, 0
        %s211 = smul.addr %s208, 16
        %s212 = sadd.s32 %s210, %s211
        %s213 = smul.addr %s212, 8
        %s214 = scalar_lea.vmem %s2, %s213
        %v215 = vld [vmem:[%s0] sm:$0xff]
        %v216 = vld [vmem:[%s0 + $0x8] sm:$0xff]
        %v217 = vld [vmem:[%s0 + $0x10] sm:$0xff]
        %v218 = vld [vmem:[%s0 + $0x18] sm:$0xff]
        %v219 = vld [vmem:[%s0 + $0x20] sm:$0xff]
        %v220 = vld [vmem:[%s0 + $0x28] sm:$0xff]
        %v221 = vld [vmem:[%s0 + $0x30] sm:$0xff]
        %v222 = vld [vmem:[%s0 + $0x38] sm:$0xff]
        %v223 = vld [vmem:[%s0 + $0x40] sm:$0xff]
        %v224 = vld [vmem:[%s0 + $0x48] sm:$0xff]
        %v225 = vld [vmem:[%s0 + $0x50] sm:$0xff]
        %v226 = vld [vmem:[%s0 + $0x58] sm:$0xff]
        %v227 = vld [vmem:[%s0 + $0x60] sm:$0xff]
        %v228 = vld [vmem:[%s0 + $0x68] sm:$0xff]
        %v229 = vld [vmem:[%s0 + $0x70] sm:$0xff]
        %v230 = vld [vmem:[%s0 + $0x78] sm:$0xff]
        %v231 = vld [vmem:[%s0 + $0x80] sm:$0xff]
        %v232 = vld [vmem:[%s0 + $0x88] sm:$0xff]
        %v233 = vld [vmem:[%s0 + $0x90] sm:$0xff]
        %v234 = vld [vmem:[%s0 + $0x98] sm:$0xff]
        %v235 = vld [vmem:[%s206] sm:$0xff]
        %v236 = vld [vmem:[%s206 + $0x8] sm:$0xff]
        %vm237 = vcmask 130048
        %v239 = vsel %vm237, %v215, 0
        %v242 = vsel %vm237, %v216, 0
        %v245 = vsel %vm237, %v217, 0
        %v248 = vsel %vm237, %v218, 0
        %v251 = vsel %vm237, %v219, 0
        %v254 = vsel %vm237, %v220, 0
        %v257 = vsel %vm237, %v221, 0
        %v260 = vsel %vm237, %v222, 0
        %v263 = vsel %vm237, %v223, 0
        %v266 = vsel %vm237, %v224, 0
        %v269 = vsel %vm237, %v225, 0
        %v272 = vsel %vm237, %v226, 0
        %v275 = vsel %vm237, %v227, 0
        %v278 = vsel %vm237, %v228, 0
        %v281 = vsel %vm237, %v229, 0
        %v284 = vsel %vm237, %v230, 0
        %v287 = vsel %vm237, %v231, 0
        %v290 = vsel %vm237, %v232, 0
        %v293 = vsel %vm237, %v233, 0
        %v296 = vsel %vm237, %v234, 0
        %298 = vmatprep.subr.mxu0 0.0
        %299 = vmatpush1.msra.mxu0 %v235
        %300 = vmatprep.subr.mxu0 0.0
        %301 = vmatpush1.msra.mxu0 %v236
        %302 = vmatprep.subr.mxu0 0.0
        %303 = vmatpush1.msra.mxu0 0.0
        %304 = vmatprep.subr.mxu0 0.0
        %305 = vmatpush1.msra.mxu0 0.0
        %306 = vmatprep.subr.mxu0 0.0
        %307 = vmatpush1.msra.mxu0 0.0
        %308 = vmatprep.subr.mxu0 0.0
        %309 = vmatpush1.msra.mxu0 0.0
        %310 = vmatprep.subr.mxu0 0.0
        %311 = vmatpush1.msra.mxu0 0.0
        %312 = vmatprep.subr.mxu0 0.0
        %313 = vmatpush1.msra.mxu0 0.0
        %314 = vmatprep.subr.mxu0 0.0
        %315 = vmatpush1.msra.mxu0 0.0
        %316 = vmatprep.subr.mxu0 0.0
        %317 = vmatpush1.msra.mxu0 0.0
        %318 = vmatprep.subr.mxu0 0.0
        %319 = vmatpush1.msra.mxu0 0.0
        %320 = vmatprep.subr.mxu0 0.0
        %321 = vmatpush1.msra.mxu0 0.0
        %322 = vmatprep.subr.mxu0 0.0
        %323 = vmatpush1.msra.mxu0 0.0
        %324 = vmatprep.subr.mxu0 0.0
        %325 = vmatpush1.msra.mxu0 0.0
        %326 = vmatprep.subr.mxu0 0.0
        %327 = vmatpush1.msra.mxu0 0.0
        %328 = vmatprep.subr.mxu0 0.0
        %329 = vmatpush1.msra.mxu0 0.0
        %330 = vmatprep.subr.mxu0 0.0
        %331 = vmatpush1.msra.mxu0 0.0
        %332 = vmatprep.subr.mxu0 0.0
        %333 = vmatpush1.msra.mxu0 0.0
        %334 = vmatprep.subr.mxu0 0.0
        %335 = vmatpush1.msra.mxu0 0.0
        %336 = vmatprep.subr.mxu0 0.0
        %337 = vmatpush1.msra.mxu0 0.0
        %338 = vmatprep.subr.mxu0 0.0
        %339 = vmatpush1.msra.mxu0 0.0
        %340 = vmatprep.subr.mxu0 0.0
        %341 = vmatpush1.msra.mxu0 0.0
        %342 = vmatprep.subr.mxu0 0.0
        %343 = vmatpush1.msra.mxu0 0.0
        %344 = vmatprep.subr.mxu0 0.0
        %345 = vmatpush1.msra.mxu0 0.0
        %346 = vmatprep.subr.mxu0 0.0
        %347 = vmatpush1.msra.mxu0 0.0
        %348 = vmatprep.subr.mxu0 0.0
        %349 = vmatpush1.msra.mxu0 0.0
        %350 = vmatprep.subr.mxu0 0.0
        %351 = vmatpush1.msra.mxu0 0.0
        %352 = vmatprep.subr.mxu0 0.0
        %353 = vmatpush1.msra.mxu0 0.0
        %354 = vmatprep.subr.mxu0 0.0
        %355 = vmatpush1.msra.mxu0 0.0
        %356 = vmatprep.subr.mxu0 0.0
        %357 = vmatpush1.msra.mxu0 0.0
        %358 = vmatprep.subr.mxu0 0.0
        %359 = vmatpush1.msra.mxu0 0.0
        %360 = vmatprep.subr.mxu0 0.0
        %361 = vmatpush1.msra.mxu0 0.0
        %362 = vmatprep.mubr.f32.mxu0 0.0
        %363 = vmatmul.mubr.f32.gmra.mrb[0].mxu0 %v239
        %v364 = vpop.f32.mrb[0].mxu0
        %v365 = vadd.f32 0.0, %v364
        %v366 = vpop.f32.mrb[0].mxu0
        %367 = vmatprep.mubr.f32.mxu0 0.0
        %368 = vmatmul.mubr.f32.gmra.mrb[0].mxu0 %v242
        %v369 = vpop.f32.mrb[0].mxu0
        %v370 = vadd.f32 0.0, %v369
        %v371 = vpop.f32.mrb[0].mxu0
        %372 = vmatprep.mubr.f32.mxu0 0.0
        %373 = vmatmul.mubr.f32.gmra.mrb[0].mxu0 %v245
        %v374 = vpop.f32.mrb[0].mxu0
        %v375 = vadd.f32 0.0, %v374
        %v376 = vpop.f32.mrb[0].mxu0
        %377 = vmatprep.mubr.f32.mxu0 0.0
        %378 = vmatmul.mubr.f32.gmra.mrb[0].mxu0 %v248
        %v379 = vpop.f32.mrb[0].mxu0
        %v380 = vadd.f32 0.0, %v379
        %v381 = vpop.f32.mrb[0].mxu0
        %382 = vmatprep.mubr.f32.mxu0 0.0
        %383 = vmatmul.mubr.f32.gmra.mrb[0].mxu0 %v251
        %v384 = vpop.f32.mrb[0].mxu0
        %v385 = vadd.f32 0.0, %v384
        %v386 = vpop.f32.mrb[0].mxu0
        %387 = vmatprep.mubr.f32.mxu0 0.0
        %388 = vmatmul.mubr.f32.gmra.mrb[0].mxu0 %v254
        %v389 = vpop.f32.mrb[0].mxu0
        %v390 = vadd.f32 0.0, %v389
        %v391 = vpop.f32.mrb[0].mxu0
        %392 = vmatprep.mubr.f32.mxu0 0.0
        %393 = vmatmul.mubr.f32.gmra.mrb[0].mxu0 %v257
        %v394 = vpop.f32.mrb[0].mxu0
        %v395 = vadd.f32 0.0, %v394
        %v396 = vpop.f32.mrb[0].mxu0
        %397 = vmatprep.mubr.f32.mxu0 0.0
        %398 = vmatmul.mubr.f32.gmra.mrb[0].mxu0 %v260
        %v399 = vpop.f32.mrb[0].mxu0
        %v400 = vadd.f32 0.0, %v399
        %v401 = vpop.f32.mrb[0].mxu0
        %402 = vmatprep.mubr.f32.mxu0 0.0
        %403 = vmatmul.mubr.f32.gmra.mrb[0].mxu0 %v263
        %v404 = vpop.f32.mrb[0].mxu0
        %v405 = vadd.f32 0.0, %v404
        %v406 = vpop.f32.mrb[0].mxu0
        %407 = vmatprep.mubr.f32.mxu0 0.0
        %408 = vmatmul.mubr.f32.gmra.mrb[0].mxu0 %v266
        %v409 = vpop.f32.mrb[0].mxu0
        %v410 = vadd.f32 0.0, %v409
        %v411 = vpop.f32.mrb[0].mxu0
        %412 = vmatprep.mubr.f32.mxu0 0.0
        %413 = vmatmul.mubr.f32.gmra.mrb[0].mxu0 %v269
        %v414 = vpop.f32.mrb[0].mxu0
        %v415 = vadd.f32 0.0, %v414
        %v416 = vpop.f32.mrb[0].mxu0
        %417 = vmatprep.mubr.f32.mxu0 0.0
        %418 = vmatmul.mubr.f32.gmra.mrb[0].mxu0 %v272
        %v419 = vpop.f32.mrb[0].mxu0
        %v420 = vadd.f32 0.0, %v419
        %v421 = vpop.f32.mrb[0].mxu0
        %422 = vmatprep.mubr.f32.mxu0 0.0
        %423 = vmatmul.mubr.f32.gmra.mrb[0].mxu0 %v275
        %v424 = vpop.f32.mrb[0].mxu0
        %v425 = vadd.f32 0.0, %v424
        %v426 = vpop.f32.mrb[0].mxu0
        %427 = vmatprep.mubr.f32.mxu0 0.0
        %428 = vmatmul.mubr.f32.gmra.mrb[0].mxu0 %v278
        %v429 = vpop.f32.mrb[0].mxu0
        %v430 = vadd.f32 0.0, %v429
        %v431 = vpop.f32.mrb[0].mxu0
        %432 = vmatprep.mubr.f32.mxu0 0.0
        %433 = vmatmul.mubr.f32.gmra.mrb[0].mxu0 %v281
        %v434 = vpop.f32.mrb[0].mxu0
        %v435 = vadd.f32 0.0, %v434
        %v436 = vpop.f32.mrb[0].mxu0
        %437 = vmatprep.mubr.f32.mxu0 0.0
        %438 = vmatmul.mubr.f32.gmra.mrb[0].mxu0 %v284
        %v439 = vpop.f32.mrb[0].mxu0
        %v440 = vadd.f32 0.0, %v439
        %v441 = vpop.f32.mrb[0].mxu0
        %442 = vmatprep.mubr.f32.mxu0 0.0
        %443 = vmatmul.mubr.f32.gmra.mrb[0].mxu0 %v287
        %v444 = vpop.f32.mrb[0].mxu0
        %v445 = vadd.f32 0.0, %v444
        %v446 = vpop.f32.mrb[0].mxu0
        %447 = vmatprep.mubr.f32.mxu0 0.0
        %448 = vmatmul.mubr.f32.gmra.mrb[0].mxu0 %v290
        %v449 = vpop.f32.mrb[0].mxu0
        %v450 = vadd.f32 0.0, %v449
        %v451 = vpop.f32.mrb[0].mxu0
        %452 = vmatprep.mubr.f32.mxu0 0.0
        %453 = vmatmul.mubr.f32.gmra.mrb[0].mxu0 %v293
        %v454 = vpop.f32.mrb[0].mxu0
        %v455 = vadd.f32 0.0, %v454
        %v456 = vpop.f32.mrb[0].mxu0
        %457 = vmatprep.mubr.f32.mxu0 0.0
        %458 = vmatmul.mubr.f32.gmra.mrb[0].mxu0 %v296
        %v459 = vpop.f32.mrb[0].mxu0
        %v460 = vadd.f32 0.0, %v459
        %v461 = vpop.f32.mrb[0].mxu0
        %462 = vdwg.mxu0
        %vm463 = vcmask 64512
        %464 = vst.msk [vmem:[%s214] sm:$0xff] %vm463, %v365
        %465 = vst.msk [vmem:[%s214 + $0x8] sm:$0xff] %vm463, %v370
        %466 = vst.msk [vmem:[%s214 + $0x10] sm:$0xff] %vm463, %v375
        %467 = vst.msk [vmem:[%s214 + $0x18] sm:$0xff] %vm463, %v380
        %468 = vst.msk [vmem:[%s214 + $0x20] sm:$0xff] %vm463, %v385
        %469 = vst.msk [vmem:[%s214 + $0x28] sm:$0xff] %vm463, %v390
        %470 = vst.msk [vmem:[%s214 + $0x30] sm:$0xff] %vm463, %v395
        %471 = vst.msk [vmem:[%s214 + $0x38] sm:$0xff] %vm463, %v400
        %472 = vst.msk [vmem:[%s214 + $0x40] sm:$0xff] %vm463, %v405
        %473 = vst.msk [vmem:[%s214 + $0x48] sm:$0xff] %vm463, %v410
        %474 = vst.msk [vmem:[%s214 + $0x50] sm:$0xff] %vm463, %v415
        %475 = vst.msk [vmem:[%s214 + $0x58] sm:$0xff] %vm463, %v420
        %476 = vst.msk [vmem:[%s214 + $0x60] sm:$0xff] %vm463, %v425
        %477 = vst.msk [vmem:[%s214 + $0x68] sm:$0xff] %vm463, %v430
        %478 = vst.msk [vmem:[%s214 + $0x70] sm:$0xff] %vm463, %v435
        %479 = vst.msk [vmem:[%s214 + $0x78] sm:$0xff] %vm463, %v440
        %480 = vst.msk [vmem:[%s198] sm:$0xff] %vm463, %v445
        %481 = vst.msk [vmem:[%s198 + $0x8] sm:$0xff] %vm463, %v450
        %482 = vst.msk [vmem:[%s198 + $0x10] sm:$0xff] %vm463, %v455
        %483 = vst.msk [vmem:[%s198 + $0x18] sm:$0xff] %vm463, %v460
        %p484 = scmp.lt.s32.totalorder %s22, 1
        %s485 = scalar_select %p484, %s22, 1
        %p486 = scmp.lt.s32.totalorder %s23, 0
        %s487 = scalar_select %p486, %s23, 0
        %s488 = smul.addr %s485, 16
        %s489 = sadd.s32 %s487, %s488
        %s490 = smul.addr %s489, 8
        %s491 = scalar_lea.vmem %s2, %s490
        %s492 = sand.u32 %s117, 1
        %s493 = scalar_lea.sflag [#allocation3], %s492
        %s494 = sand.u32 %s117, 1
        %s495 = smul.addr %s494, 32
        %s496 = scalar_lea.vmem [#allocation2], %s495
        // Predicated region
        $region29: #{tpu_custom_call.1} parent=27 // pred_check
          %p497 = pneg %p99
        $region30: #{tpu_custom_call.1} parent=27 // pred_check_branch
          %499 = sbr.rel (%p497) target = $region32
        $region31: #{tpu_custom_call.1} parent=27 // pred_region
          _
        $region32: #{tpu_custom_call.1} parent=27 // pred_fallthru
          _
        // Predicated region
        $region33: #{tpu_custom_call.1} parent=27 // pred_check
          %p500 = pneg %p127
        $region34: #{tpu_custom_call.1} parent=27 // pred_check_branch
          %502 = sbr.rel (%p500) target = $region36
        $region35: #{tpu_custom_call.1} parent=27 // pred_region
          %s504 = ssub.s32 512, 512
          %505 = vsyncadd %s493, %s504
          %s506 = smul.addr %s22, 4
          %s507 = sadd.s32 %s23, %s506
          %s508 = smul.addr %s507, 128
          %s509 = scalar_lea.hbm %s3, %s508
          %s510 = sshll.u32 %s496, 4
          %s511 = int_to_ptr.vmem [resolvable:$true] %s510
          %516 = dma.vmem_to_hbm [thread:$0]  %s511, 512, %s509, %s493, 128, 128, 8
        $region36: #{tpu_custom_call.1} parent=27 // pred_fallthru
          _
      $region28: #{tpu_custom_call.1} parent=5 // pred_fallthru
        _
      %p517 = scmp.le.s32.totalorder 2, %s13
      // Predicated region
      $region37: #{tpu_custom_call.1} parent=5 // pred_check
        %p518 = pneg %p517
      $region38: #{tpu_custom_call.1} parent=5 // pred_check_branch
        %520 = sbr.rel (%p518) target = $region40
      $region39: #{tpu_custom_call.1} parent=5 // pred_region
        %s521 = ssub.s32 %s13, 2
        // Predicated region
        $region41: #{tpu_custom_call.1} parent=39 // pred_check
          %p522 = pneg %p105
        $region42: #{tpu_custom_call.1} parent=39 // pred_check_branch
          %524 = sbr.rel (%p522) target = $region44
        $region43: #{tpu_custom_call.1} parent=39 // pred_region
          %p525 = scmp.lt.s32.totalorder %s24, 1
          %s526 = scalar_select %p525, %s24, 1
          %p527 = scmp.lt.s32.totalorder %s25, 0
          %s528 = scalar_select %p527, %s25, 0
          %s529 = smul.addr %s526, 16
          %s530 = sadd.s32 %s528, %s529
          %s531 = smul.addr %s530, 8
          %s532 = scalar_lea.vmem %s2, %s531
        $region44: #{tpu_custom_call.1} parent=39 // pred_fallthru
          _
        // Predicated region
        $region45: #{tpu_custom_call.1} parent=39 // pred_check
          %p533 = pneg %p133
        $region46: #{tpu_custom_call.1} parent=39 // pred_check_branch
          %535 = sbr.rel (%p533) target = $region48
        $region47: #{tpu_custom_call.1} parent=39 // pred_region
          %s536 = sand.u32 %s118, 1
          %s537 = scalar_lea.sflag [#allocation3], %s536
          %s538 = sand.u32 %s118, 1
          %s539 = smul.addr %s538, 32
          %s540 = scalar_lea.vmem [#allocation2], %s539
          %541 = dma.done %s537, 512
        $region48: #{tpu_custom_call.1} parent=39 // pred_fallthru
          _
      $region40: #{tpu_custom_call.1} parent=5 // pred_fallthru
        _
    $region6: #{tpu_custom_call.1} parent=1 // loop_footer
      %s17 = sadd.s32 1, %s13
    $region7: #{tpu_custom_call.1} parent=1 // loop_footer_branch
      %12 = sbr.rel target = $region3
    $region8: #{tpu_custom_call.1} parent=1 // loop_exit
      _
    %542 = vsyncpa [#allocation3], 1
    %s543 = scalar_lea.sflag [#allocation3], 1
    %544 = vsyncpa %s543, 1

</llo_original>
